<compile_context>
chip_gen: v7x
topology: tpu7x:2x2x1
jax: 0.10.0
libtpu: 0.0.40
codegen_flags: <defaults>
</compile_context>

<pallas_src>
import functools

import jax
import jax.numpy as jnp
from jax.experimental import pallas as pl
from jax.experimental.pallas import tpu as pltpu

LANE = 128            # lane width (last dim of every block)
SUBLANE = 8           # f32 sublane granularity
MAX_TILE_ROWS = 512   # rows per grid step: 512*128*4 B = 256 KiB per buffer
                      # (2 inputs x 2 pipeline buffers = 1 MiB VMEM -> fits
                      #  comfortably on v5e/v6e/v7x scoped VMEM)


def _tree_fold_rows(x, tile_rows):
    """Sum groups of SUBLANE rows: (tile_rows, LANE) -> (SUBLANE, LANE).

    Pairwise tree of static, vreg-aligned (8, 128) slices: no slice crosses an
    (8, 128) tile boundary (layout-friendly, no relayout copies) and the
    log-depth add tree keeps the dependency chain short.
    """
    parts = [x[g * SUBLANE:(g + 1) * SUBLANE, :]
             for g in range(tile_rows // SUBLANE)]
    while len(parts) > 1:
        nxt = [parts[i] + parts[i + 1] for i in range(0, len(parts) - 1, 2)]
        if len(parts) % 2:
            nxt.append(parts[-1])
        parts = nxt
    return parts[0]


def _powerlaw_partial_kernel(p_ref, t_ref, spec_ref, cplx_ref, *,
                             power, eps, tile_rows, valid_rows, mask_last):
    """One grid step: (tile_rows, 128) tile -> (8, 128) partial sums."""
    # Cast to f32 in-kernel (no wrapper up-cast => no extra HBM pass when the
    # inputs are bf16/f16; a no-op for f32 inputs).
    p = p_ref[...].astype(jnp.float32)
    t = t_ref[...].astype(jnp.float32)

    # (x + eps) ** power written as exp(power * log(x + eps)): only the two
    # EUP transcendentals per element, no general-pow compare/select filler.
    p_pow = jnp.exp(power * jnp.log(p + eps))
    t_pow = jnp.exp(power * jnp.log(t + eps))

    d_spec = jnp.abs(t_pow) - jnp.abs(p_pow)   # spec_loss operand
    d_cplx = t_pow - p_pow                     # complex_loss operand

    if mask_last:
        # The last block may extend past the array (grid = cdiv(rows, tile));
        # out-of-bounds rows contain garbage, so zero their contribution.
        # Static Python branch: only compiled in when rows % tile_rows != 0.
        row0 = pl.program_id(0) * tile_rows
        row_ids = row0 + jax.lax.broadcasted_iota(jnp.int32, d_cplx.shape, 0)
        keep = row_ids < valid_rows
        d_spec = jnp.where(keep, d_spec, 0.0)
        d_cplx = jnp.where(keep, d_cplx, 0.0)

    spec_ref[...] = _tree_fold_rows(d_spec * d_spec, tile_rows)
    cplx_ref[...] = _tree_fold_rows(d_cplx * d_cplx, tile_rows)


def powerlaw_compressed_loss(prediction, target, *, power=0.3,
                             complex_loss_ratio=0.113, epsilon=1e-16):
    assert prediction.shape == target.shape
    n = prediction.size  # MSELoss(reduction='mean') divides by total elements

    p = prediction.reshape(-1)
    t = target.reshape(-1)

    # Lane-dense 2-D view.  Pad only to the 8*128 granularity needed for the
    # reshape (<= 1023 zeros, skipped entirely when numel already aligns);
    # identical zero pads in p and t contribute 0 to both sums.
    pad = (-n) % (SUBLANE * LANE)
    if pad:
        p = jnp.pad(p, (0, pad))
        t = jnp.pad(t, (0, pad))
    rows = (n + pad) // LANE                       # multiple of 8
    p2 = p.reshape(rows, LANE)
    t2 = t.reshape(rows, LANE)

    tile_rows = rows if rows <= MAX_TILE_ROWS else MAX_TILE_ROWS
    num_blocks = (rows + tile_rows - 1) // tile_rows
    mask_last = (rows % tile_rows) != 0            # ragged last block?

    kernel = functools.partial(
        _powerlaw_partial_kernel,
        power=float(power),
        eps=float(epsilon),
        tile_rows=tile_rows,
        valid_rows=rows,
        mask_last=mask_last,
    )

    itemsize = jnp.dtype(prediction.dtype).itemsize
    cost = pl.CostEstimate(
        flops=10 * n,
        transcendentals=4 * n,
        bytes_accessed=2 * n * itemsize + 2 * num_blocks * SUBLANE * LANE * 4,
    )

    partial_shape = jax.ShapeDtypeStruct((num_blocks * SUBLANE, LANE),
                                         jnp.float32)
    spec_part, cplx_part = pl.pallas_call(
        kernel,
        out_shape=(partial_shape, partial_shape),
        grid=(num_blocks,),
        in_specs=[
            pl.BlockSpec((tile_rows, LANE), lambda i: (i, 0)),
            pl.BlockSpec((tile_rows, LANE), lambda i: (i, 0)),
        ],
        out_specs=(
            pl.BlockSpec((SUBLANE, LANE), lambda i: (i, 0)),
            pl.BlockSpec((SUBLANE, LANE), lambda i: (i, 0)),
        ),
        compiler_params=pltpu.CompilerParams(
            dimension_semantics=("parallel",)),
        cost_estimate=cost,
    )(p2, t2)

    inv_n = 1.0 / float(n)
    spec_loss = jnp.sum(spec_part) * inv_n
    complex_loss = jnp.sum(cplx_part) * inv_n
    return spec_loss + complex_loss * complex_loss_ratio


def _reference(prediction, target, *, power=0.3, complex_loss_ratio=0.113,
               epsilon=1e-16):
    p = jnp.power(prediction.astype(jnp.float32) + epsilon, power)
    t = jnp.power(target.astype(jnp.float32) + epsilon, power)
    spec_loss = jnp.mean((jnp.abs(t) - jnp.abs(p)) ** 2)
    complex_loss = jnp.mean((t - p) ** 2)
    return spec_loss + complex_loss * complex_loss_ratio


if __name__ == "__main__":
    key = jax.random.PRNGKey(0)
    k1, k2 = jax.random.split(key)
    # Spectrogram-like non-negative inputs, NCHW: (batch=2, ch=4, 16, 16)
    prediction = jax.random.uniform(k1, (2, 4, 16, 16), dtype=jnp.float32)
    target = jax.random.uniform(k2, (2, 4, 16, 16), dtype=jnp.float32)

    loss = jax.jit(powerlaw_compressed_loss)(prediction, target)
    loss = jax.block_until_ready(loss)

    ref = jax.block_until_ready(_reference(prediction, target))
    assert jnp.allclose(loss, ref, rtol=1e-5, atol=1e-6), (loss, ref)
    print("KERNEL_OK")
</pallas_src>

<mosaic_0001>
module attributes {stable_mosaic.version = 11 : i64} {
  func.func @_powerlaw_partial_kernel(%arg0: i32, %arg1: memref<16x128xf32, #tpu.memory_space<vmem>>, %arg2: memref<16x128xf32, #tpu.memory_space<vmem>>, %arg3: memref<8x128xf32, #tpu.memory_space<vmem>>, %arg4: memref<8x128xf32, #tpu.memory_space<vmem>>) attributes {dimension_semantics = [#tpu.dimension_semantics<parallel>], iteration_bounds = array<i64: 1>, scalar_prefetch = 0 : i64, scratch_operands = 0 : i64, tpu.core_type = #tpu.core_type<tc>, window_params = [{transform_indices = @transform_0, window_bounds = array<i64: 16, 128>}, {transform_indices = @transform_1, window_bounds = array<i64: 16, 128>}, {transform_indices = @transform_2, window_bounds = array<i64: 8, 128>}, {transform_indices = @transform_3, window_bounds = array<i64: 8, 128>}]} {
    %c0 = arith.constant 0 : index
    %c0_0 = arith.constant 0 : index
    %0 = vector.load %arg1[%c0, %c0_0] : memref<16x128xf32, #tpu.memory_space<vmem>>, vector<16x128xf32>
    %c0_1 = arith.constant 0 : index
    %c0_2 = arith.constant 0 : index
    %1 = vector.load %arg2[%c0_1, %c0_2] : memref<16x128xf32, #tpu.memory_space<vmem>>, vector<16x128xf32>
    %cst = arith.constant 1.000000e-16 : f32
    %2 = vector.broadcast %cst : f32 to vector<16x128xf32>
    %3 = arith.addf %0, %2 : vector<16x128xf32>
    %4 = math.log %3 : vector<16x128xf32>
    %cst_3 = arith.constant 3.000000e-01 : f32
    %5 = vector.broadcast %cst_3 : f32 to vector<16x128xf32>
    %6 = arith.mulf %5, %4 : vector<16x128xf32>
    %7 = math.exp %6 : vector<16x128xf32>
    %cst_4 = arith.constant 1.000000e-16 : f32
    %8 = vector.broadcast %cst_4 : f32 to vector<16x128xf32>
    %9 = arith.addf %1, %8 : vector<16x128xf32>
    %10 = math.log %9 : vector<16x128xf32>
    %cst_5 = arith.constant 3.000000e-01 : f32
    %11 = vector.broadcast %cst_5 : f32 to vector<16x128xf32>
    %12 = arith.mulf %11, %10 : vector<16x128xf32>
    %13 = math.exp %12 : vector<16x128xf32>
    %14 = math.absf %13 : vector<16x128xf32>
    %15 = math.absf %7 : vector<16x128xf32>
    %16 = arith.subf %14, %15 : vector<16x128xf32>
    %17 = arith.subf %13, %7 : vector<16x128xf32>
    %18 = arith.mulf %16, %16 : vector<16x128xf32>
    %19 = vector.extract_strided_slice %18 {offsets = [0, 0], sizes = [8, 128], strides = [1, 1]} : vector<16x128xf32> to vector<8x128xf32>
    %20 = vector.extract_strided_slice %18 {offsets = [8, 0], sizes = [8, 128], strides = [1, 1]} : vector<16x128xf32> to vector<8x128xf32>
    %21 = arith.addf %19, %20 : vector<8x128xf32>
    %c0_6 = arith.constant 0 : index
    %c0_7 = arith.constant 0 : index
    %22 = vector.load %arg3[%c0_6, %c0_7] : memref<8x128xf32, #tpu.memory_space<vmem>>, vector<8x128xf32>
    tpu.vector_store %arg3[%c0_6, %c0_7], %21 {strides = array<i32>} : memref<8x128xf32, #tpu.memory_space<vmem>>, vector<8x128xf32>,
    %23 = arith.mulf %17, %17 : vector<16x128xf32>
    %24 = vector.extract_strided_slice %23 {offsets = [0, 0], sizes = [8, 128], strides = [1, 1]} : vector<16x128xf32> to vector<8x128xf32>
    %25 = vector.extract_strided_slice %23 {offsets = [8, 0], sizes = [8, 128], strides = [1, 1]} : vector<16x128xf32> to vector<8x128xf32>
    %26 = arith.addf %24, %25 : vector<8x128xf32>
    %c0_8 = arith.constant 0 : index
    %c0_9 = arith.constant 0 : index
    %27 = vector.load %arg4[%c0_8, %c0_9] : memref<8x128xf32, #tpu.memory_space<vmem>>, vector<8x128xf32>
    tpu.vector_store %arg4[%c0_8, %c0_9], %26 {strides = array<i32>} : memref<8x128xf32, #tpu.memory_space<vmem>>, vector<8x128xf32>,
    return
  }
  func.func @transform_0(%arg0: i32) -> (i32, i32) {
    %c0_i32 = arith.constant 0 : i32
    %c0_i32_0 = arith.constant 0 : i32
    return %arg0, %c0_i32 : i32, i32
  }
  func.func @transform_1(%arg0: i32) -> (i32, i32) {
    %c0_i32 = arith.constant 0 : i32
    %c0_i32_0 = arith.constant 0 : i32
    return %arg0, %c0_i32 : i32, i32
  }
  func.func @transform_2(%arg0: i32) -> (i32, i32) {
    %c0_i32 = arith.constant 0 : i32
    %c0_i32_0 = arith.constant 0 : i32
    return %arg0, %c0_i32 : i32, i32
  }
  func.func @transform_3(%arg0: i32) -> (i32, i32) {
    %c0_i32 = arith.constant 0 : i32
    %c0_i32_0 = arith.constant 0 : i32
    return %arg0, %c0_i32 : i32, i32
  }
}

</mosaic_0001>

<llo_original>
// kernel: powerlaw_compressed_loss.1
$region0: #{powerlaw_compressed_loss.1}
  #allocation0 [shape = 'u32[]', space=smem, size = 0x4, offset = 0x4, fixed_abs, tag = 'smem constant byte address 0x4 - core index']
  #allocation1 [shape = 'u32[144,128]{1,0:T(1,128)}', space=vmem, size = 0x12000, scoped, tag = 'internal scratch']
  %s0 = inlined_call_operand.vmem [shape: f32[16,128], index: 0, kind: input, shape index: {}]
  %s1 = inlined_call_operand.vmem [shape: f32[16,128], index: 1, kind: input, shape index: {}]
  %s2 = inlined_call_operand.vmem [shape: f32[8,128], index: 2, kind: output, shape index: {0}]
  %s3 = inlined_call_operand.vmem [shape: f32[8,128], index: 3, kind: output, shape index: {1}]
  %4 = xla_tuple %s2, %s3
  %s5 = sld [smem:[#allocation0]]
  $region26: #{powerlaw_compressed_loss.1} parent=0
    _
  %s7 = ssub.s32 1, %s5
  %s8 = scalar_select 0, %s7, %s5
  // Predicated region
  $region2: #{powerlaw_compressed_loss.1} parent=0 // pred_check
    _
  $region3: #{powerlaw_compressed_loss.1} parent=0 // pred_check_branch
    %10 = sbr.rel (0) target = $region5
  $region4: #{powerlaw_compressed_loss.1} parent=0 // pred_region
    _
  $region5: #{powerlaw_compressed_loss.1} parent=0 // pred_fallthru
    _
  // Predicated region
  $region6: #{powerlaw_compressed_loss.1} parent=0 // pred_check
    _
  $region7: #{powerlaw_compressed_loss.1} parent=0 // pred_check_branch
    %12 = sbr.rel (0) target = $region9
  $region8: #{powerlaw_compressed_loss.1} parent=0 // pred_region
    _
  $region9: #{powerlaw_compressed_loss.1} parent=0 // pred_fallthru
    _
  %v13 = vld [vmem:[%s0] sm:$0xff]
  %v14 = vld [vmem:[%s0 + $0x8] sm:$0xff]
  %v15 = vld [vmem:[%s1] sm:$0xff]
  %v16 = vld [vmem:[%s1 + $0x8] sm:$0xff]
  %v17 = vadd.f32 %v13, 1e-16
  %v18 = vadd.f32 %v14, 1e-16
  %v19 = vlog2.pop %v17
  %v20 = vmul.f32 %v19, 0.6931472
  %v21 = vlog2.pop %v18
  %v22 = vmul.f32 %v21, 0.6931472
  %v23 = vmul.f32 %v20, 0.3
  %v24 = vmul.f32 %v22, 0.3
  %v25 = vmul.f32 %v23, 1.442695
  %v26 = vpow.pop %v25
  %v27 = vmul.f32 %v24, 1.442695
  %v28 = vpow.pop %v27
  %v29 = vadd.f32 %v15, 1e-16
  %v30 = vadd.f32 %v16, 1e-16
  %v31 = vlog2.pop %v29
  %v32 = vmul.f32 %v31, 0.6931472
  %v33 = vlog2.pop %v30
  %v34 = vmul.f32 %v33, 0.6931472
  %v35 = vmul.f32 %v32, 0.3
  %v36 = vmul.f32 %v34, 0.3
  %v37 = vmul.f32 %v35, 1.442695
  %v38 = vpow.pop %v37
  %v39 = vmul.f32 %v36, 1.442695
  %v40 = vpow.pop %v39
  %v41 = vand.u32 2147483647, %v38
  %v42 = vand.u32 2147483647, %v40
  %v43 = vand.u32 2147483647, %v26
  %v44 = vand.u32 2147483647, %v28
  %v45 = vsub.f32 %v41, %v43
  %v46 = vsub.f32 %v42, %v44
  %v47 = vsub.f32 %v38, %v26
  %v48 = vsub.f32 %v40, %v28
  %v49 = vmul.f32 %v45, %v45
  %v50 = vmul.f32 %v46, %v46
  %v51 = vadd.f32 %v49, %v50
  %52 = vst [vmem:[%s2] sm:$0xff] %v51
  %v53 = vmul.f32 %v47, %v47
  %v54 = vmul.f32 %v48, %v48
  %v55 = vadd.f32 %v53, %v54
  %56 = vst [vmem:[%s3] sm:$0xff] %v55
  // Predicated region
  $region10: #{powerlaw_compressed_loss.1} parent=0 // pred_check
    _
  $region11: #{powerlaw_compressed_loss.1} parent=0 // pred_check_branch
    %58 = sbr.rel (0) target = $region13
  $region12: #{powerlaw_compressed_loss.1} parent=0 // pred_region
    _
  $region13: #{powerlaw_compressed_loss.1} parent=0 // pred_fallthru
    _
  // Predicated region
  $region14: #{powerlaw_compressed_loss.1} parent=0 // pred_check
    _
  $region15: #{powerlaw_compressed_loss.1} parent=0 // pred_check_branch
    %60 = sbr.rel (0) target = $region17
  $region16: #{powerlaw_compressed_loss.1} parent=0 // pred_region
    _
  $region17: #{powerlaw_compressed_loss.1} parent=0 // pred_fallthru
    _
  // Predicated region
  $region18: #{powerlaw_compressed_loss.1} parent=0 // pred_check
    _
  $region19: #{powerlaw_compressed_loss.1} parent=0 // pred_check_branch
    %62 = sbr.rel (0) target = $region21
  $region20: #{powerlaw_compressed_loss.1} parent=0 // pred_region
    _
  $region21: #{powerlaw_compressed_loss.1} parent=0 // pred_fallthru
    _
  // Predicated region
  $region22: #{powerlaw_compressed_loss.1} parent=0 // pred_check
    _
  $region23: #{powerlaw_compressed_loss.1} parent=0 // pred_check_branch
    %64 = sbr.rel (0) target = $region25
  $region24: #{powerlaw_compressed_loss.1} parent=0 // pred_region
    _
  $region25: #{powerlaw_compressed_loss.1} parent=0 // pred_fallthru
    _

</llo_original>
